<compile_context>
chip_gen: v7x
topology: tpu7x:2x2x1
jax: 0.10.0
libtpu: 0.0.40
codegen_flags: <defaults>
</compile_context>

<pallas_src>
import functools

import jax
import jax.numpy as jnp
from jax.experimental import pallas as pl
from jax.experimental.pallas import tpu as pltpu

LN_EPS = 1e-5  # nn.LayerNorm default


def _round_up(x, m):
    return (x + m - 1) // m * m


def _vmem_limit_bytes():
    """~3/4 of physical VMEM (96 MiB on v5e/v6e, 48 MiB on v7x)."""
    cap = 64 * 1024 * 1024  # conservative fallback (v7x physical size)
    try:
        info = pltpu.get_tpu_info()
        cap = int(getattr(info, "vmem_capacity_bytes", cap)) or cap
    except Exception:
        pass
    return max((cap * 3) // 4, 32 * 1024 * 1024)


def _choose_tb(B, sub):
    """Batch tile: >=2 tiles when possible (v7x megacore), else full extent."""
    if B >= 2 * sub:
        # Ragged last tile is fine: TB is sublane-aligned and Pallas masks
        # boundary-block stores, so no batch padding is ever needed.
        return min(256, _round_up(pl.cdiv(B, 2), sub))
    return B  # full extent is always a legal block dim


def _choose_tc(E, C_pad, w_itemsize, vmem_limit):
    """Class tile: keep the whole weight resident if it fits ~1/3 of VMEM."""
    w_cap = vmem_limit // 3
    if E * C_pad * w_itemsize <= w_cap:
        return C_pad
    tc = (w_cap // 2) // (E * w_itemsize)        # double-buffered weight tiles
    return min(C_pad, max(128, (tc // 128) * 128))


def _choose_tn(TB, N, E, itemsize, sub, resident_bytes, vmem_limit):
    """Token tile: largest that keeps 2 x-buffers inside the VMEM budget."""
    avail = vmem_limit - resident_bytes - (4 * 1024 * 1024)   # pipeline headroom
    per_buf = max(avail // 2, 1)                              # x is double-buffered
    tn = per_buf // (TB * E * itemsize)
    if tn >= N:
        return N
    return max(sub, (tn // sub) * sub)


def _const_spec(block_shape, index_map, single_buffer):
    """BlockSpec for VMEM-resident params: try a single buffer (the block
    index never changes so double-buffering is pure waste), falling back to
    the default spec if this Pallas version rejects pl.Buffered(1)."""
    if single_buffer:
        try:
            return pl.BlockSpec(block_shape, index_map,
                                pipeline_mode=pl.Buffered(1))
        except Exception:
            pass
    return pl.BlockSpec(block_shape, index_map)


def _head_kernel(x_ref, gamma_ref, beta_ref, w_ref, b_ref, o_ref,
                 acc_ref, y_ref, *, inv_n, n_tokens, token_tile, ragged_n,
                 num_class_tiles):
    # x_ref: (TB, TN, E)   gamma/beta: (1, E)   w: (E, TC)   b: (1, TC)
    # o_ref: (TB, TC)      acc_ref / y_ref: (TB, E) f32 scratch
    n = pl.program_id(1)          # token-tile (reduction) axis
    c = pl.program_id(2)          # class-tile axis (innermost)
    last_n = pl.num_programs(1) - 1

    def _accumulate():
        @pl.when(n == 0)
        def _init():
            acc_ref[...] = jnp.zeros_like(acc_ref)

        xb = x_ref[...]
        if ragged_n:
            # Mask tokens past the true sequence length (ragged last tile) --
            # replaces the host-side jnp.pad of x.
            tok = jax.lax.broadcasted_iota(jnp.int32, xb.shape, 1)
            xb = jnp.where(tok + n * token_tile < n_tokens, xb, 0)
        # f32 token-sum without materializing a widened copy of the tile.
        acc_ref[...] += jnp.sum(xb, axis=1, dtype=jnp.float32)

    def _layernorm():
        pooled = acc_ref[...] * inv_n                           # mean over tokens
        mu = jnp.mean(pooled, axis=-1, keepdims=True)
        var = jnp.mean((pooled - mu) ** 2, axis=-1, keepdims=True)  # biased var
        xn = (pooled - mu) * jax.lax.rsqrt(var + LN_EPS)
        y_ref[...] = (xn * gamma_ref[...].astype(jnp.float32)
                      + beta_ref[...].astype(jnp.float32))

    # Token-sum accumulation runs once per (batch-tile, token-tile).
    if num_class_tiles > 1:
        @pl.when(c == 0)
        def _():
            _accumulate()
    else:
        _accumulate()

    # Finalize on the last token step: LayerNorm once per batch tile, then a
    # Linear (E -> TC) on the MXU for each class tile.
    @pl.when(n == last_n)
    def _finalize():
        if num_class_tiles > 1:
            @pl.when(c == 0)
            def _():
                _layernorm()
        else:
            _layernorm()
        out = jnp.dot(y_ref[...].astype(w_ref.dtype), w_ref[...],
                      preferred_element_type=jnp.float32)
        o_ref[...] = (out + b_ref[...].astype(jnp.float32)).astype(o_ref.dtype)


def classification_head(x, gamma, beta, w_t, bias, *,
                        max_token_tile=None, max_class_tile=None):
    """x: (B, N, E); gamma/beta: (E,); w_t: (E, C) (= Linear.weight.T);
    bias: (C,) -> (B, C).  max_*_tile are optional test/tuning caps."""
    B, N, E = x.shape
    C = w_t.shape[1]
    itemsize = x.dtype.itemsize
    sub = max(8, 32 // max(1, itemsize))     # 8 f32 / 16 bf16 / 32 int8-fp8

    # Pad only the tiny parameter arrays to a lane-aligned class count.
    C_pad = _round_up(C, 128)
    if C_pad != C:
        w_t = jnp.pad(w_t, ((0, 0), (0, C_pad - C)))
        bias = jnp.pad(bias, (0, C_pad - C))

    vmem_limit = _vmem_limit_bytes()

    TB = _choose_tb(B, sub)
    TC = _choose_tc(E, C_pad, w_t.dtype.itemsize, vmem_limit)
    if max_class_tile is not None:
        TC = min(TC, max(128, (max_class_tile // 128) * 128))
    n_c = pl.cdiv(C_pad, TC)

    w_bufs = 1 if n_c == 1 else 2
    resident = (E * TC * w_t.dtype.itemsize * w_bufs     # weight tile(s)
                + TC * bias.dtype.itemsize * w_bufs      # bias tile(s)
                + 2 * E * gamma.dtype.itemsize           # gamma + beta
                + 2 * TB * TC * itemsize                 # output (double-buffered)
                + 2 * TB * E * 4)                        # acc + y f32 scratch
    TN = _choose_tn(TB, N, E, itemsize, sub, resident, vmem_limit)
    if max_token_tile is not None:
        cap = min(max_token_tile, N)
        if cap < TN:
            TN = cap if cap == N else max(sub, (cap // sub) * sub)

    n_b = pl.cdiv(B, TB)
    n_n = pl.cdiv(N, TN)
    ragged_n = (N % TN) != 0

    gamma2 = gamma.reshape(1, E)
    beta2 = beta.reshape(1, E)
    bias2 = bias.reshape(1, C_pad)

    kernel = functools.partial(
        _head_kernel, inv_n=1.0 / N, n_tokens=N, token_tile=TN,
        ragged_n=ragged_n, num_class_tiles=n_c)

    # W / bias / out index maps.  With class tiling, hold class-tile 0 while
    # the token reduction runs and only step through class tiles on the
    # finalize (last token step): x stays resident across class tiles, W is
    # streamed ~once per batch tile, and every output block is written back
    # exactly once (after its kernel write).
    if n_c == 1:
        w_index = lambda b, n, c: (0, 0)
        o_index = lambda b, n, c: (b, 0)
    elif n_n == 1:
        w_index = lambda b, n, c: (0, c)
        o_index = lambda b, n, c: (b, c)
    else:
        last_n = n_n - 1
        w_index = lambda b, n, c: (0, c * (n // last_n))   # n//last_n == 1 only at n==last
        o_index = lambda b, n, c: (b, c * (n // last_n))

    def run(single_buffer_params):
        in_specs = [
            # x: streamed over batch and token tiles (double-buffered).
            pl.BlockSpec((TB, TN, E), lambda b, n, c: (b, n, 0)),
            # params: constant block index -> DMA'd once, VMEM-resident.
            _const_spec((1, E), lambda b, n, c: (0, 0), single_buffer_params),
            _const_spec((1, E), lambda b, n, c: (0, 0), single_buffer_params),
            _const_spec((E, TC), w_index, single_buffer_params and n_c == 1),
            _const_spec((1, TC), w_index, single_buffer_params and n_c == 1),
        ]
        return pl.pallas_call(
            kernel,
            out_shape=jax.ShapeDtypeStruct((B, C_pad), x.dtype),
            grid=(n_b, n_n, n_c),
            in_specs=in_specs,
            out_specs=pl.BlockSpec((TB, TC), o_index),
            scratch_shapes=[pltpu.VMEM((TB, E), jnp.float32),   # token-sum acc
                            pltpu.VMEM((TB, E), jnp.float32)],  # LayerNorm output
            compiler_params=pltpu.CompilerParams(
                dimension_semantics=("parallel", "arbitrary", "arbitrary"),
                vmem_limit_bytes=int(vmem_limit)),
        )(x, gamma2, beta2, w_t, bias2)

    try:
        out = run(True)
    except Exception:
        # pl.Buffered(1) not supported by this Pallas build -> default
        # double-buffered params (slightly more VMEM, identical results).
        out = run(False)

    return out if C_pad == C else out[:, :C]


def _reference(x, gamma, beta, w_t, bias):
    pooled = jnp.mean(x.astype(jnp.float32), axis=1)
    mu = jnp.mean(pooled, axis=-1, keepdims=True)
    var = jnp.mean((pooled - mu) ** 2, axis=-1, keepdims=True)
    y = (pooled - mu) * jax.lax.rsqrt(var + LN_EPS) * gamma + beta
    return y @ w_t.astype(jnp.float32) + bias


if __name__ == "__main__":
    key = jax.random.PRNGKey(0)
    kx, kg, kb, kw, kbi = jax.random.split(key, 5)

    def run_case(B, N, E, C, dtype, tol, **kwargs):
        x = jax.random.normal(kx, (B, N, E), dtype=jnp.float32).astype(dtype)
        gamma = 1.0 + 0.01 * jax.random.normal(kg, (E,), dtype=jnp.float32)
        beta = 0.01 * jax.random.normal(kb, (E,), dtype=jnp.float32)
        # nn.Linear(E, C).weight is (C, E); pre-transpose to (E, C).
        w = 0.02 * jax.random.normal(kw, (C, E), dtype=jnp.float32)
        w_t = w.T.astype(dtype)
        bias = 0.01 * jax.random.normal(kbi, (C,), dtype=jnp.float32)

        out = classification_head(x, gamma, beta, w_t, bias, **kwargs)
        out = jax.block_until_ready(out)
        ref = _reference(x, gamma, beta, w_t, bias)
        assert out.shape == (B, C)
        assert jnp.allclose(out.astype(jnp.float32), ref, atol=tol, rtol=tol), (
            f"mismatch: B={B} N={N} E={E} C={C} dtype={dtype}")

    # Base case: small shapes consistent with the module (classes pad to 256).
    run_case(2, 8, 128, 200, jnp.float32, 2e-4)
    # No-padding paths: ragged tokens (in-kernel mask), split + ragged batch
    # tiles (v7x megacore), and class tiling (large-C fallback).
    run_case(18, 20, 128, 200, jnp.float32, 2e-4,
             max_token_tile=8, max_class_tile=128)
    # bf16 production path: 16-row sublane alignment, ragged last token tile.
    run_case(4, 24, 128, 200, jnp.bfloat16, 2e-2, max_token_tile=16)

    print("KERNEL_OK")
</pallas_src>

<mosaic_0001>
module attributes {stable_mosaic.version = 11 : i64} {
  func.func @_head_kernel(%arg0: i32, %arg1: i32, %arg2: i32, %arg3: memref<2x8x128xf32, #tpu.memory_space<vmem>>, %arg4: memref<1x128xf32, #tpu.memory_space<vmem>>, %arg5: memref<1x128xf32, #tpu.memory_space<vmem>>, %arg6: memref<128x256xf32, #tpu.memory_space<vmem>>, %arg7: memref<1x256xf32, #tpu.memory_space<vmem>>, %arg8: memref<2x256xf32, #tpu.memory_space<vmem>>, %arg9: memref<2x128xf32, #tpu.memory_space<vmem>>, %arg10: memref<2x128xf32, #tpu.memory_space<vmem>>) attributes {dimension_semantics = [#tpu.dimension_semantics<parallel>, #tpu.dimension_semantics<arbitrary>, #tpu.dimension_semantics<arbitrary>], iteration_bounds = array<i64: 1, 1, 1>, scalar_prefetch = 0 : i64, scratch_operands = 2 : i64, tpu.core_type = #tpu.core_type<tc>, window_params = [{transform_indices = @transform_0, window_bounds = array<i64: 2, 8, 128>}, {pipeline_mode = #tpu.pipeline_mode<synchronous>, transform_indices = @transform_1, window_bounds = array<i64: 1, 128>}, {pipeline_mode = #tpu.pipeline_mode<synchronous>, transform_indices = @transform_2, window_bounds = array<i64: 1, 128>}, {pipeline_mode = #tpu.pipeline_mode<synchronous>, transform_indices = @transform_3, window_bounds = array<i64: 128, 256>}, {pipeline_mode = #tpu.pipeline_mode<synchronous>, transform_indices = @transform_4, window_bounds = array<i64: 1, 256>}, {transform_indices = @transform_5, window_bounds = array<i64: 2, 256>}]} {
    %c0_i32 = arith.constant 0 : i32
    %0 = arith.cmpi eq, %arg1, %c0_i32 : i32
    %1 = arith.extui %0 : i1 to i32
    %c0_i32_0 = arith.constant 0 : i32
    %2 = arith.cmpi ne, %1, %c0_i32_0 : i32
    scf.if %2 {
      %cst_9 = arith.constant 0.000000e+00 : f32
      %11 = vector.broadcast %cst_9 : f32 to vector<2x128xf32>
      %c0_10 = arith.constant 0 : index
      %c0_11 = arith.constant 0 : index
      %12 = vector.load %arg9[%c0_10, %c0_11] : memref<2x128xf32, #tpu.memory_space<vmem>>, vector<2x128xf32>
      tpu.vector_store %arg9[%c0_10, %c0_11], %11 {strides = array<i32>} : memref<2x128xf32, #tpu.memory_space<vmem>>, vector<2x128xf32>,
    } else {
    }
    %c0 = arith.constant 0 : index
    %c0_1 = arith.constant 0 : index
    %c0_2 = arith.constant 0 : index
    %3 = vector.load %arg3[%c0, %c0_1, %c0_2] : memref<2x8x128xf32, #tpu.memory_space<vmem>>, vector<2x8x128xf32>
    %c0_3 = arith.constant 0 : index
    %c0_4 = arith.constant 0 : index
    %4 = vector.load %arg9[%c0_3, %c0_4] : memref<2x128xf32, #tpu.memory_space<vmem>>, vector<2x128xf32>
    %cst = arith.constant dense<0.000000e+00> : vector<2x128xf32>
    %5 = vector.multi_reduction <add>, %3, %cst [1] : vector<2x8x128xf32> to vector<2x128xf32>
    %6 = arith.addf %4, %5 : vector<2x128xf32>
    %c0_5 = arith.constant 0 : index
    %c0_6 = arith.constant 0 : index
    %7 = vector.load %arg9[%c0_5, %c0_6] : memref<2x128xf32, #tpu.memory_space<vmem>>, vector<2x128xf32>
    tpu.vector_store %arg9[%c0_5, %c0_6], %6 {strides = array<i32>} : memref<2x128xf32, #tpu.memory_space<vmem>>, vector<2x128xf32>,
    %c0_i32_7 = arith.constant 0 : i32
    %8 = arith.cmpi eq, %arg1, %c0_i32_7 : i32
    %9 = arith.extui %8 : i1 to i32
    %c0_i32_8 = arith.constant 0 : i32
    %10 = arith.cmpi ne, %9, %c0_i32_8 : i32
    scf.if %10 {
      %c0_9 = arith.constant 0 : index
      %c0_10 = arith.constant 0 : index
      %11 = vector.load %arg9[%c0_9, %c0_10] : memref<2x128xf32, #tpu.memory_space<vmem>>, vector<2x128xf32>
      %cst_11 = arith.constant 1.250000e-01 : f32
      %12 = vector.broadcast %cst_11 : f32 to vector<2x128xf32>
      %13 = arith.mulf %11, %12 : vector<2x128xf32>
      %cst_12 = arith.constant dense<0.000000e+00> : vector<2xf32>
      %14 = vector.multi_reduction <add>, %13, %cst_12 [1] : vector<2x128xf32> to vector<2xf32>
      %15 = vector.shape_cast %14 : vector<2xf32> to vector<2x1xf32>
      %cst_13 = arith.constant 1.280000e+02 : f32
      %16 = vector.broadcast %cst_13 : f32 to vector<2x1xf32>
      %17 = arith.divf %15, %16 : vector<2x1xf32>
      %18 = vector.broadcast %17 : vector<2x1xf32> to vector<2x128xf32>
      %19 = arith.subf %13, %18 : vector<2x128xf32>
      %20 = arith.mulf %19, %19 : vector<2x128xf32>
      %cst_14 = arith.constant dense<0.000000e+00> : vector<2xf32>
      %21 = vector.multi_reduction <add>, %20, %cst_14 [1] : vector<2x128xf32> to vector<2xf32>
      %22 = vector.shape_cast %21 : vector<2xf32> to vector<2x1xf32>
      %cst_15 = arith.constant 1.280000e+02 : f32
      %23 = vector.broadcast %cst_15 : f32 to vector<2x1xf32>
      %24 = arith.divf %22, %23 : vector<2x1xf32>
      %25 = vector.broadcast %17 : vector<2x1xf32> to vector<2x128xf32>
      %26 = arith.subf %13, %25 : vector<2x128xf32>
      %cst_16 = arith.constant 9.99999974E-6 : f32
      %27 = vector.broadcast %cst_16 : f32 to vector<2x1xf32>
      %28 = arith.addf %24, %27 : vector<2x1xf32>
      %29 = math.rsqrt %28 : vector<2x1xf32>
      %30 = vector.broadcast %29 : vector<2x1xf32> to vector<2x128xf32>
      %31 = arith.mulf %26, %30 : vector<2x128xf32>
      %c0_17 = arith.constant 0 : index
      %c0_18 = arith.constant 0 : index
      %32 = vector.load %arg4[%c0_17, %c0_18] : memref<1x128xf32, #tpu.memory_space<vmem>>, vector<1x128xf32>
      %33 = vector.broadcast %32 : vector<1x128xf32> to vector<2x128xf32>
      %34 = arith.mulf %31, %33 : vector<2x128xf32>
      %c0_19 = arith.constant 0 : index
      %c0_20 = arith.constant 0 : index
      %35 = vector.load %arg5[%c0_19, %c0_20] : memref<1x128xf32, #tpu.memory_space<vmem>>, vector<1x128xf32>
      %36 = vector.broadcast %35 : vector<1x128xf32> to vector<2x128xf32>
      %37 = arith.addf %34, %36 : vector<2x128xf32>
      %c0_21 = arith.constant 0 : index
      %c0_22 = arith.constant 0 : index
      %38 = vector.load %arg10[%c0_21, %c0_22] : memref<2x128xf32, #tpu.memory_space<vmem>>, vector<2x128xf32>
      tpu.vector_store %arg10[%c0_21, %c0_22], %37 {strides = array<i32>} : memref<2x128xf32, #tpu.memory_space<vmem>>, vector<2x128xf32>,
      %c0_23 = arith.constant 0 : index
      %c0_24 = arith.constant 0 : index
      %39 = vector.load %arg10[%c0_23, %c0_24] : memref<2x128xf32, #tpu.memory_space<vmem>>, vector<2x128xf32>
      %c0_25 = arith.constant 0 : index
      %c0_26 = arith.constant 0 : index
      %40 = vector.load %arg6[%c0_25, %c0_26] : memref<128x256xf32, #tpu.memory_space<vmem>>, vector<128x256xf32>
      %cst_27 = arith.constant dense<0.000000e+00> : vector<2x256xf32>
      %41 = tpu.matmul %39, %40, %cst_27 {dimension_numbers = #tpu.dot_dimension_numbers<[1], [0], [0], [1], [0, 0, 1, 1], [], []>} : vector<2x128xf32>, vector<128x256xf32>, vector<2x256xf32> -> vector<2x256xf32>
      %c0_28 = arith.constant 0 : index
      %c0_29 = arith.constant 0 : index
      %42 = vector.load %arg7[%c0_28, %c0_29] : memref<1x256xf32, #tpu.memory_space<vmem>>, vector<1x256xf32>
      %43 = vector.broadcast %42 : vector<1x256xf32> to vector<2x256xf32>
      %44 = arith.addf %41, %43 : vector<2x256xf32>
      %c0_30 = arith.constant 0 : index
      %c0_31 = arith.constant 0 : index
      %45 = vector.load %arg8[%c0_30, %c0_31] : memref<2x256xf32, #tpu.memory_space<vmem>>, vector<2x256xf32>
      tpu.vector_store %arg8[%c0_30, %c0_31], %44 {strides = array<i32>} : memref<2x256xf32, #tpu.memory_space<vmem>>, vector<2x256xf32>,
    } else {
    }
    return
  }
  func.func @transform_0(%arg0: i32, %arg1: i32, %arg2: i32) -> (i32, i32, i32) {
    %c0_i32 = arith.constant 0 : i32
    %c0_i32_0 = arith.constant 0 : i32
    return %arg0, %arg1, %c0_i32 : i32, i32, i32
  }
  func.func @transform_1(%arg0: i32, %arg1: i32, %arg2: i32) -> (i32, i32) {
    %c0_i32 = arith.constant 0 : i32
    %c0_i32_0 = arith.constant 0 : i32
    %c0_i32_1 = arith.constant 0 : i32
    return %c0_i32, %c0_i32_0 : i32, i32
  }
  func.func @transform_2(%arg0: i32, %arg1: i32, %arg2: i32) -> (i32, i32) {
    %c0_i32 = arith.constant 0 : i32
    %c0_i32_0 = arith.constant 0 : i32
    %c0_i32_1 = arith.constant 0 : i32
    return %c0_i32, %c0_i32_0 : i32, i32
  }
  func.func @transform_3(%arg0: i32, %arg1: i32, %arg2: i32) -> (i32, i32) {
    %c0_i32 = arith.constant 0 : i32
    %c0_i32_0 = arith.constant 0 : i32
    %c0_i32_1 = arith.constant 0 : i32
    return %c0_i32, %c0_i32_0 : i32, i32
  }
  func.func @transform_4(%arg0: i32, %arg1: i32, %arg2: i32) -> (i32, i32) {
    %c0_i32 = arith.constant 0 : i32
    %c0_i32_0 = arith.constant 0 : i32
    %c0_i32_1 = arith.constant 0 : i32
    return %c0_i32, %c0_i32_0 : i32, i32
  }
  func.func @transform_5(%arg0: i32, %arg1: i32, %arg2: i32) -> (i32, i32) {
    %c0_i32 = arith.constant 0 : i32
    %c0_i32_0 = arith.constant 0 : i32
    return %arg0, %c0_i32 : i32, i32
  }
}

module attributes {stable_mosaic.version = 11 : i64} {
  func.func @_head_kernel(%arg0: i32, %arg1: i32, %arg2: i32, %arg3: memref<2x8x128xf32, #tpu.memory_space<vmem>>, %arg4: memref<1x128xf32, #tpu.memory_space<vmem>>, %arg5: memref<1x128xf32, #tpu.memory_space<vmem>>, %arg6: memref<128x256xf32, #tpu.memory_space<vmem>>, %arg7: memref<1x256xf32, #tpu.memory_space<vmem>>, %arg8: memref<2x256xf32, #tpu.memory_space<vmem>>, %arg9: memref<2x128xf32, #tpu.memory_space<vmem>>, %arg10: memref<2x128xf32, #tpu.memory_space<vmem>>) attributes {dimension_semantics = [#tpu.dimension_semantics<parallel>, #tpu.dimension_semantics<arbitrary>, #tpu.dimension_semantics<arbitrary>], iteration_bounds = array<i64: 1, 1, 1>, scalar_prefetch = 0 : i64, scratch_operands = 2 : i64, tpu.core_type = #tpu.core_type<tc>, window_params = [{transform_indices = @transform_0, window_bounds = array<i64: 2, 8, 128>}, {pipeline_mode = #tpu.pipeline_mode<synchronous>, transform_indices = @transform_1, window_bounds = array<i64: 1, 128>}, {pipeline_mode = #tpu.pipeline_mode<synchronous>, transform_indices = @transform_2, window_bounds = array<i64: 1, 128>}, {pipeline_mode = #tpu.pipeline_mode<synchronous>, transform_indices = @transform_3, window_bounds = array<i64: 128, 256>}, {pipeline_mode = #tpu.pipeline_mode<synchronous>, transform_indices = @transform_4, window_bounds = array<i64: 1, 256>}, {transform_indices = @transform_5, window_bounds = array<i64: 2, 256>}]} {
    %c0_i32 = arith.constant 0 : i32
    %0 = arith.cmpi eq, %arg1, %c0_i32 : i32
    %1 = arith.extui %0 : i1 to i32
    %c0_i32_0 = arith.constant 0 : i32
    %2 = arith.cmpi ne, %1, %c0_i32_0 : i32
    scf.if %2 {
      %cst_9 = arith.constant 0.000000e+00 : f32
      %11 = vector.broadcast %cst_9 : f32 to vector<2x128xf32>
      %c0_10 = arith.constant 0 : index
      %c0_11 = arith.constant 0 : index
      %12 = vector.load %arg9[%c0_10, %c0_11] : memref<2x128xf32, #tpu.memory_space<vmem>>, vector<2x128xf32>
      tpu.vector_store %arg9[%c0_10, %c0_11], %11 {strides = array<i32>} : memref<2x128xf32, #tpu.memory_space<vmem>>, vector<2x128xf32>,
    } else {
    }
    %c0 = arith.constant 0 : index
    %c0_1 = arith.constant 0 : index
    %c0_2 = arith.constant 0 : index
    %3 = vector.load %arg3[%c0, %c0_1, %c0_2] : memref<2x8x128xf32, #tpu.memory_space<vmem>>, vector<2x8x128xf32>
    %c0_3 = arith.constant 0 : index
    %c0_4 = arith.constant 0 : index
    %4 = vector.load %arg9[%c0_3, %c0_4] : memref<2x128xf32, #tpu.memory_space<vmem>>, vector<2x128xf32>
    %cst = arith.constant dense<0.000000e+00> : vector<2x128xf32>
    %5 = vector.multi_reduction <add>, %3, %cst [1] : vector<2x8x128xf32> to vector<2x128xf32>
    %6 = arith.addf %4, %5 : vector<2x128xf32>
    %c0_5 = arith.constant 0 : index
    %c0_6 = arith.constant 0 : index
    %7 = vector.load %arg9[%c0_5, %c0_6] : memref<2x128xf32, #tpu.memory_space<vmem>>, vector<2x128xf32>
    tpu.vector_store %arg9[%c0_5, %c0_6], %6 {strides = array<i32>} : memref<2x128xf32, #tpu.memory_space<vmem>>, vector<2x128xf32>,
    %c0_i32_7 = arith.constant 0 : i32
    %8 = arith.cmpi eq, %arg1, %c0_i32_7 : i32
    %9 = arith.extui %8 : i1 to i32
    %c0_i32_8 = arith.constant 0 : i32
    %10 = arith.cmpi ne, %9, %c0_i32_8 : i32
    scf.if %10 {
      %c0_9 = arith.constant 0 : index
      %c0_10 = arith.constant 0 : index
      %11 = vector.load %arg9[%c0_9, %c0_10] : memref<2x128xf32, #tpu.memory_space<vmem>>, vector<2x128xf32>
      %cst_11 = arith.constant 1.250000e-01 : f32
      %12 = vector.broadcast %cst_11 : f32 to vector<2x128xf32>
      %13 = arith.mulf %11, %12 : vector<2x128xf32>
      %cst_12 = arith.constant dense<0.000000e+00> : vector<2xf32>
      %14 = vector.multi_reduction <add>, %13, %cst_12 [1] : vector<2x128xf32> to vector<2xf32>
      %15 = vector.shape_cast %14 : vector<2xf32> to vector<2x1xf32>
      %cst_13 = arith.constant 1.280000e+02 : f32
      %16 = vector.broadcast %cst_13 : f32 to vector<2x1xf32>
      %17 = arith.divf %15, %16 : vector<2x1xf32>
      %18 = vector.broadcast %17 : vector<2x1xf32> to vector<2x128xf32>
      %19 = arith.subf %13, %18 : vector<2x128xf32>
      %20 = arith.mulf %19, %19 : vector<2x128xf32>
      %cst_14 = arith.constant dense<0.000000e+00> : vector<2xf32>
      %21 = vector.multi_reduction <add>, %20, %cst_14 [1] : vector<2x128xf32> to vector<2xf32>
      %22 = vector.shape_cast %21 : vector<2xf32> to vector<2x1xf32>
      %cst_15 = arith.constant 1.280000e+02 : f32
      %23 = vector.broadcast %cst_15 : f32 to vector<2x1xf32>
      %24 = arith.divf %22, %23 : vector<2x1xf32>
      %25 = vector.broadcast %17 : vector<2x1xf32> to vector<2x128xf32>
      %26 = arith.subf %13, %25 : vector<2x128xf32>
      %cst_16 = arith.constant 9.99999974E-6 : f32
      %27 = vector.broadcast %cst_16 : f32 to vector<2x1xf32>
      %28 = arith.addf %24, %27 : vector<2x1xf32>
      %29 = math.rsqrt %28 : vector<2x1xf32>
      %30 = vector.broadcast %29 : vector<2x1xf32> to vector<2x128xf32>
      %31 = arith.mulf %26, %30 : vector<2x128xf32>
      %c0_17 = arith.constant 0 : index
      %c0_18 = arith.constant 0 : index
      %32 = vector.load %arg4[%c0_17, %c0_18] : memref<1x128xf32, #tpu.memory_space<vmem>>, vector<1x128xf32>
      %33 = vector.broadcast %32 : vector<1x128xf32> to vector<2x128xf32>
      %34 = arith.mulf %31, %33 : vector<2x128xf32>
      %c0_19 = arith.constant 0 : index
      %c0_20 = arith.constant 0 : index
      %35 = vector.load %arg5[%c0_19, %c0_20] : memref<1x128xf32, #tpu.memory_space<vmem>>, vector<1x128xf32>
      %36 = vector.broadcast %35 : vector<1x128xf32> to vector<2x128xf32>
      %37 = arith.addf %34, %36 : vector<2x128xf32>
      %c0_21 = arith.constant 0 : index
      %c0_22 = arith.constant 0 : index
      %38 = vector.load %arg10[%c0_21, %c0_22] : memref<2x128xf32, #tpu.memory_space<vmem>>, vector<2x128xf32>
      tpu.vector_store %arg10[%c0_21, %c0_22], %37 {strides = array<i32>} : memref<2x128xf32, #tpu.memory_space<vmem>>, vector<2x128xf32>,
      %c0_23 = arith.constant 0 : index
      %c0_24 = arith.constant 0 : index
      %39 = vector.load %arg10[%c0_23, %c0_24] : memref<2x128xf32, #tpu.memory_space<vmem>>, vector<2x128xf32>
      %c0_25 = arith.constant 0 : index
      %c0_26 = arith.constant 0 : index
      %40 = vector.load %arg6[%c0_25, %c0_26] : memref<128x256xf32, #tpu.memory_space<vmem>>, vector<128x256xf32>
      %cst_27 = arith.constant dense<0.000000e+00> : vector<2x256xf32>
      %41 = tpu.matmul %39, %40, %cst_27 {dimension_numbers = #tpu.dot_dimension_numbers<[1], [0], [0], [1], [0, 0, 1, 1], [], []>} : vector<2x128xf32>, vector<128x256xf32>, vector<2x256xf32> -> vector<2x256xf32>
      %c0_28 = arith.constant 0 : index
      %c0_29 = arith.constant 0 : index
      %42 = vector.load %arg7[%c0_28, %c0_29] : memref<1x256xf32, #tpu.memory_space<vmem>>, vector<1x256xf32>
      %43 = vector.broadcast %42 : vector<1x256xf32> to vector<2x256xf32>
      %44 = arith.addf %41, %43 : vector<2x256xf32>
      %c0_30 = arith.constant 0 : index
      %c0_31 = arith.constant 0 : index
      %45 = vector.load %arg8[%c0_30, %c0_31] : memref<2x256xf32, #tpu.memory_space<vmem>>, vector<2x256xf32>
      tpu.vector_store %arg8[%c0_30, %c0_31], %44 {strides = array<i32>} : memref<2x256xf32, #tpu.memory_space<vmem>>, vector<2x256xf32>,
    } else {
    }
    return
  }
  func.func @transform_0(%arg0: i32, %arg1: i32, %arg2: i32) -> (i32, i32, i32) {
    %c0_i32 = arith.constant 0 : i32
    %c0_i32_0 = arith.constant 0 : i32
    return %arg0, %arg1, %c0_i32 : i32, i32, i32
  }
  func.func @transform_1(%arg0: i32, %arg1: i32, %arg2: i32) -> (i32, i32) {
    %c0_i32 = arith.constant 0 : i32
    %c0_i32_0 = arith.constant 0 : i32
    %c0_i32_1 = arith.constant 0 : i32
    return %c0_i32, %c0_i32_0 : i32, i32
  }
  func.func @transform_2(%arg0: i32, %arg1: i32, %arg2: i32) -> (i32, i32) {
    %c0_i32 = arith.constant 0 : i32
    %c0_i32_0 = arith.constant 0 : i32
    %c0_i32_1 = arith.constant 0 : i32
    return %c0_i32, %c0_i32_0 : i32, i32
  }
  func.func @transform_3(%arg0: i32, %arg1: i32, %arg2: i32) -> (i32, i32) {
    %c0_i32 = arith.constant 0 : i32
    %c0_i32_0 = arith.constant 0 : i32
    %c0_i32_1 = arith.constant 0 : i32
    return %c0_i32, %c0_i32_0 : i32, i32
  }
  func.func @transform_4(%arg0: i32, %arg1: i32, %arg2: i32) -> (i32, i32) {
    %c0_i32 = arith.constant 0 : i32
    %c0_i32_0 = arith.constant 0 : i32
    %c0_i32_1 = arith.constant 0 : i32
    return %c0_i32, %c0_i32_0 : i32, i32
  }
  func.func @transform_5(%arg0: i32, %arg1: i32, %arg2: i32) -> (i32, i32) {
    %c0_i32 = arith.constant 0 : i32
    %c0_i32_0 = arith.constant 0 : i32
    return %arg0, %c0_i32 : i32, i32
  }
}

</mosaic_0001>

<llo_original>
// kernel: tpu_custom_call.1
$region0: #{tpu_custom_call.1}
  #allocation0 [shape = 'u32[]', space=smem, size = 0x4, offset = 0x4, fixed_abs, tag = 'smem constant byte address 0x4 - core index']
  #allocation1 [shape = 'u32[144,128]{1,0:T(1,128)}', space=vmem, size = 0x12000, scoped, tag = 'internal scratch']
  #allocation2 [shape = 'f32[2,128]{1,0:T(2,128)}', space=vmem, size = 0x400, scoped, tag = 'scratch operand']
  #allocation3 [shape = 'f32[2,128]{1,0:T(2,128)}', space=vmem, size = 0x400, scoped, tag = 'scratch operand']
  %s0 = inlined_call_operand.hbm [shape: f32[2,8,128], index: 0, kind: input, shape index: {}]
  %s1 = inlined_call_operand.vmem [shape: f32[1,128], index: 1, kind: input, shape index: {}]
  %s2 = inlined_call_operand.vmem [shape: f32[1,128], index: 2, kind: input, shape index: {}]
  %s3 = inlined_call_operand.hbm [shape: f32[128,256], index: 3, kind: input, shape index: {}]
  %s4 = inlined_call_operand.vmem [shape: f32[1,256], index: 4, kind: input, shape index: {}]
  %s5 = inlined_call_operand.hbm [shape: f32[2,256], index: 5, kind: output, shape index: {}]
  %s6 = sld [smem:[#allocation0]]
  $region46: #{tpu_custom_call.1} parent=0
    _
  %s8 = ssub.s32 1, %s6
  %s9 = scalar_select 0, %s8, %s6
  $region1: #{tpu_custom_call.1} parent=0
    #allocation4 [shape = 'u8[8192]{0}', space=vmem, size = 0x2000, scoped, tag = 'input window, operand 0, single buffered']
    #allocation5 [shape = 's32[1]{0}', space=sflag, size = 0x4, scoped, tag = 'scoped memory for tpu_custom_call.1']
    #allocation6 [shape = 's32[1]{0}', space=sflag, size = 0x4, scoped, tag = 'scoped memory for tpu_custom_call.1']
    #allocation7 [shape = 'u8[131072]{0}', space=vmem, size = 0x20000, scoped, tag = 'input window, operand 3, single buffered']
    #allocation8 [shape = 's32[1]{0}', space=sflag, size = 0x4, scoped, tag = 'scoped memory for tpu_custom_call.1']
    #allocation9 [shape = 'u8[2048]{0}', space=vmem, size = 0x800, scoped, tag = 'output window, operand 0, single buffered']
    %10 = vsyncpa [#allocation5], 0
    %11 = vsyncpa [#allocation8], 0
    %12 = vsyncpa [#allocation6], 0
    // Predicated region
    $region2: #{tpu_custom_call.1} parent=1 // pred_check
      _
    $region3: #{tpu_custom_call.1} parent=1 // pred_check_branch
      %14 = sbr.rel (0) target = $region5
    $region4: #{tpu_custom_call.1} parent=1 // pred_region
      %s16 = ssub.s32 256, 256
      %17 = vsyncadd [#allocation5], %s16
      %s18 = sshll.u32 [#allocation4], 4
      %s19 = int_to_ptr.vmem [resolvable:$true] %s18
      %24 = dma.hbm_to_vmem [thread:$0]  %s0, 256, %s19, [#allocation5], 128, 128, 8
    $region5: #{tpu_custom_call.1} parent=1 // pred_fallthru
      _
    // Predicated region
    $region6: #{tpu_custom_call.1} parent=1 // pred_check
      _
    $region7: #{tpu_custom_call.1} parent=1 // pred_check_branch
      %26 = sbr.rel (0) target = $region9
    $region8: #{tpu_custom_call.1} parent=1 // pred_region
      _
    $region9: #{tpu_custom_call.1} parent=1 // pred_fallthru
      _
    // Predicated region
    $region10: #{tpu_custom_call.1} parent=1 // pred_check
      _
    $region11: #{tpu_custom_call.1} parent=1 // pred_check_branch
      %28 = sbr.rel (0) target = $region13
    $region12: #{tpu_custom_call.1} parent=1 // pred_region
      _
    $region13: #{tpu_custom_call.1} parent=1 // pred_fallthru
      _
    // Predicated region
    $region14: #{tpu_custom_call.1} parent=1 // pred_check
      _
    $region15: #{tpu_custom_call.1} parent=1 // pred_check_branch
      %30 = sbr.rel (0) target = $region17
    $region16: #{tpu_custom_call.1} parent=1 // pred_region
      %s32 = ssub.s32 4096, 4096
      %33 = vsyncadd [#allocation8], %s32
      %s34 = sshll.u32 [#allocation7], 4
      %s35 = int_to_ptr.vmem [resolvable:$true] %s34
      %40 = dma.hbm_to_vmem [thread:$0]  %s3, 4096, %s35, [#allocation8], 256, 256, 16
    $region17: #{tpu_custom_call.1} parent=1 // pred_fallthru
      _
    // Predicated region
    $region18: #{tpu_custom_call.1} parent=1 // pred_check
      _
    $region19: #{tpu_custom_call.1} parent=1 // pred_check_branch
      %42 = sbr.rel (0) target = $region21
    $region20: #{tpu_custom_call.1} parent=1 // pred_region
      _
    $region21: #{tpu_custom_call.1} parent=1 // pred_fallthru
      _
    // Predicated region
    $region22: #{tpu_custom_call.1} parent=1 // pred_check
      _
    $region23: #{tpu_custom_call.1} parent=1 // pred_check_branch
      %44 = sbr.rel (0) target = $region25
    $region24: #{tpu_custom_call.1} parent=1 // pred_region
      %45 = dma.done [#allocation5], 256
    $region25: #{tpu_custom_call.1} parent=1 // pred_fallthru
      _
    // Predicated region
    $region26: #{tpu_custom_call.1} parent=1 // pred_check
      _
    $region27: #{tpu_custom_call.1} parent=1 // pred_check_branch
      %47 = sbr.rel (0) target = $region29
    $region28: #{tpu_custom_call.1} parent=1 // pred_region
      %48 = dma.done [#allocation8], 4096
    $region29: #{tpu_custom_call.1} parent=1 // pred_fallthru
      _
    %p49 = scmp.eq.s32.totalorder 0, 0
    // Predicated region
    $region30: #{tpu_custom_call.1} parent=1 // pred_check
      %p50 = pneg %p49
    $region31: #{tpu_custom_call.1} parent=1 // pred_check_branch
      %52 = sbr.rel (%p50) target = $region33
    $region32: #{tpu_custom_call.1} parent=1 // pred_region
      %53 = vst [vmem:[#allocation2] sm:$0x3] 0.0
    $region33: #{tpu_custom_call.1} parent=1 // pred_fallthru
      _
    %v54 = vld [vmem:[#allocation4] sm:$0xff]
    %v55 = vld [vmem:[#allocation4 + $0x8] sm:$0xff]
    %v56 = vld [vmem:[#allocation2] sm:$0x3]
    %v57 = vrot.slane %v54, 4
    %v58 = vadd.f32 %v54, %v57
    %v59 = vrot.slane %v58, 2
    %v60 = vadd.f32 %v58, %v59
    %v61 = vrot.slane %v60, 1
    %v62 = vadd.f32 %v60, %v61
    %v63 = vrot.slane %v55, 4
    %v64 = vadd.f32 %v55, %v63
    %v65 = vrot.slane %v64, 2
    %v66 = vadd.f32 %v64, %v65
    %v67 = vrot.slane %v66, 1
    %v68 = vadd.f32 %v66, %v67
    %vm71 = vcmask 1041409
    %v72 = vsel %vm71, %v68, %v62
    %v74 = vadd.f32 %v56, %v72
    %75 = vst [vmem:[#allocation2] sm:$0x3] %v74
    // Predicated region
    $region34: #{tpu_custom_call.1} parent=1 // pred_check
      %p76 = pneg %p49
    $region35: #{tpu_custom_call.1} parent=1 // pred_check_branch
      %78 = sbr.rel (%p76) target = $region37
    $region36: #{tpu_custom_call.1} parent=1 // pred_region
      %v79 = vld [vmem:[#allocation2] sm:$0x3]
      %v80 = vmul.f32 %v79, 0.125
      %vm81 = vcmask 1041408
      %v82 = vsel %vm81, %v80, 0.0
      %83 = vadd.xlane.f32.xlu0 %v82
      %v84 = vpop.xlane.xlu0 %83
      %v85 = vrcp.pop 128.0
      %v86 = vmul.f32 %v84, %v85
      %v87 = vsub.f32 %v80, %v86
      %v88 = vmul.f32 %v87, %v87
      %v89 = vsel %vm81, %v88, 0.0
      %90 = vadd.xlane.f32.xlu0 %v89
      %v91 = vpop.xlane.xlu0 %90
      %v92 = vmul.f32 %v91, %v85
      %v93 = vadd.f32 %v92, 1e-05
      %v94 = vrsqrt.pop %v93
      %v95 = vmul.f32 %v87, %v94
      %v96 = vld [vmem:[%s1] sm:$0x1]
      %v98 = vlaneseq
      %v99 = vshrl.u32 %v98, 7
      %v100 = vsub.s32 0, %v99
      %v101 = vrot.slane %v96, %v100
      %v103 = vmul.f32 %v95, %v101
      %v104 = vld [vmem:[%s2] sm:$0x1]
      %v106 = vlaneseq
      %v107 = vshrl.u32 %v106, 7
      %v108 = vsub.s32 0, %v107
      %v109 = vrot.slane %v104, %v108
      %v111 = vadd.f32 %v103, %v109
      %112 = vst [vmem:[#allocation3] sm:$0x3] %v111
      %v113 = vld [vmem:[#allocation3] sm:$0x3]
      %v114 = vld [vmem:[#allocation7] sm:$0xff]
      %v115 = vld [vmem:[#allocation7 + $0x8] sm:$0xff]
      %v116 = vld [vmem:[#allocation7 + $0x10] sm:$0xff]
      %v117 = vld [vmem:[#allocation7 + $0x18] sm:$0xff]
      %v118 = vld [vmem:[#allocation7 + $0x20] sm:$0xff]
      %v119 = vld [vmem:[#allocation7 + $0x28] sm:$0xff]
      %v120 = vld [vmem:[#allocation7 + $0x30] sm:$0xff]
      %v121 = vld [vmem:[#allocation7 + $0x38] sm:$0xff]
      %v122 = vld [vmem:[#allocation7 + $0x40] sm:$0xff]
      %v123 = vld [vmem:[#allocation7 + $0x48] sm:$0xff]
      %v124 = vld [vmem:[#allocation7 + $0x50] sm:$0xff]
      %v125 = vld [vmem:[#allocation7 + $0x58] sm:$0xff]
      %v126 = vld [vmem:[#allocation7 + $0x60] sm:$0xff]
      %v127 = vld [vmem:[#allocation7 + $0x68] sm:$0xff]
      %v128 = vld [vmem:[#allocation7 + $0x70] sm:$0xff]
      %v129 = vld [vmem:[#allocation7 + $0x78] sm:$0xff]
      %v130 = vld [vmem:[#allocation7 + $0x80] sm:$0xff]
      %v131 = vld [vmem:[#allocation7 + $0x88] sm:$0xff]
      %v132 = vld [vmem:[#allocation7 + $0x90] sm:$0xff]
      %v133 = vld [vmem:[#allocation7 + $0x98] sm:$0xff]
      %v134 = vld [vmem:[#allocation7 + $0xa0] sm:$0xff]
      %v135 = vld [vmem:[#allocation7 + $0xa8] sm:$0xff]
      %v136 = vld [vmem:[#allocation7 + $0xb0] sm:$0xff]
      %v137 = vld [vmem:[#allocation7 + $0xb8] sm:$0xff]
      %v138 = vld [vmem:[#allocation7 + $0xc0] sm:$0xff]
      %v139 = vld [vmem:[#allocation7 + $0xc8] sm:$0xff]
      %v140 = vld [vmem:[#allocation7 + $0xd0] sm:$0xff]
      %v141 = vld [vmem:[#allocation7 + $0xd8] sm:$0xff]
      %v142 = vld [vmem:[#allocation7 + $0xe0] sm:$0xff]
      %v143 = vld [vmem:[#allocation7 + $0xe8] sm:$0xff]
      %v144 = vld [vmem:[#allocation7 + $0xf0] sm:$0xff]
      %v145 = vld [vmem:[#allocation7 + $0xf8] sm:$0xff]
      %v146 = vld [vmem:[%s4] sm:$0x3]
      %v148 = vlaneseq
      %v149 = vshrl.u32 %v148, 7
      %v150 = vsub.s32 0, %v149
      %v151 = vrot.slane %v146, %v150
      %v152 = vlaneseq
      %v153 = vshrl.u32 %v152, 7
      %v154 = vsub.s32 1, %v153
      %v155 = vrot.slane %v146, %v154
      %158 = vmatprep.subr.mxu0 %v115
      %159 = vmatpush1.msra.mxu0 %v114
      %160 = vmatprep.subr.mxu0 %v117
      %161 = vmatpush1.msra.mxu0 %v116
      %162 = vmatprep.subr.mxu0 %v119
      %163 = vmatpush1.msra.mxu0 %v118
      %164 = vmatprep.subr.mxu0 %v121
      %165 = vmatpush1.msra.mxu0 %v120
      %166 = vmatprep.subr.mxu0 %v123
      %167 = vmatpush1.msra.mxu0 %v122
      %168 = vmatprep.subr.mxu0 %v125
      %169 = vmatpush1.msra.mxu0 %v124
      %170 = vmatprep.subr.mxu0 %v127
      %171 = vmatpush1.msra.mxu0 %v126
      %172 = vmatprep.subr.mxu0 %v129
      %173 = vmatpush1.msra.mxu0 %v128
      %174 = vmatprep.subr.mxu0 %v131
      %175 = vmatpush1.msra.mxu0 %v130
      %176 = vmatprep.subr.mxu0 %v133
      %177 = vmatpush1.msra.mxu0 %v132
      %178 = vmatprep.subr.mxu0 %v135
      %179 = vmatpush1.msra.mxu0 %v134
      %180 = vmatprep.subr.mxu0 %v137
      %181 = vmatpush1.msra.mxu0 %v136
      %182 = vmatprep.subr.mxu0 %v139
      %183 = vmatpush1.msra.mxu0 %v138
      %184 = vmatprep.subr.mxu0 %v141
      %185 = vmatpush1.msra.mxu0 %v140
      %186 = vmatprep.subr.mxu0 %v143
      %187 = vmatpush1.msra.mxu0 %v142
      %188 = vmatprep.subr.mxu0 %v145
      %189 = vmatpush1.msra.mxu0 %v144
      %190 = vmatprep.subr.mxu0 0.0
      %191 = vmatpush1.msra.mxu0 0.0
      %192 = vmatprep.subr.mxu0 0.0
      %193 = vmatpush1.msra.mxu0 0.0
      %194 = vmatprep.subr.mxu0 0.0
      %195 = vmatpush1.msra.mxu0 0.0
      %196 = vmatprep.subr.mxu0 0.0
      %197 = vmatpush1.msra.mxu0 0.0
      %198 = vmatprep.subr.mxu0 0.0
      %199 = vmatpush1.msra.mxu0 0.0
      %200 = vmatprep.subr.mxu0 0.0
      %201 = vmatpush1.msra.mxu0 0.0
      %202 = vmatprep.subr.mxu0 0.0
      %203 = vmatpush1.msra.mxu0 0.0
      %204 = vmatprep.subr.mxu0 0.0
      %205 = vmatpush1.msra.mxu0 0.0
      %206 = vmatprep.subr.mxu0 0.0
      %207 = vmatpush1.msra.mxu0 0.0
      %208 = vmatprep.subr.mxu0 0.0
      %209 = vmatpush1.msra.mxu0 0.0
      %210 = vmatprep.subr.mxu0 0.0
      %211 = vmatpush1.msra.mxu0 0.0
      %212 = vmatprep.subr.mxu0 0.0
      %213 = vmatpush1.msra.mxu0 0.0
      %214 = vmatprep.subr.mxu0 0.0
      %215 = vmatpush1.msra.mxu0 0.0
      %216 = vmatprep.subr.mxu0 0.0
      %217 = vmatpush1.msra.mxu0 0.0
      %218 = vmatprep.subr.mxu0 0.0
      %219 = vmatpush1.msra.mxu0 0.0
      %220 = vmatprep.subr.mxu0 0.0
      %221 = vmatpush1.msra.mxu0 0.0
      %222 = vmatprep.mubr.f32.mxu0 0.0
      %223 = vmatmul.mubr.f32.gmra.mrb[0].mxu0 %v113
      %v224 = vpop.f32.mrb[0].mxu0
      %v225 = vadd.f32 %v151, %v224
      %v226 = vpop.f32.mrb[0].mxu0
      %v227 = vadd.f32 %v155, %v226
      %228 = vdwg.mxu0
      %v231 = vcombine.low %v225, %v227
      %v233 = vunpack.c.l.s4 1983009808
      %v234 = vunpack.c.0.s8 %v233
      %v235 = vlaneseq
      %v236 = vshrl.u32 %v235, 7
      %v237 = vsub.s32 %v234, %v236
      %v238 = vrot.slane %v231, %v237
      %240 = vst [vmem:[#allocation9] sm:$0xf] %v238
    $region37: #{tpu_custom_call.1} parent=1 // pred_fallthru
      _
    // Predicated region
    $region38: #{tpu_custom_call.1} parent=1 // pred_check
      _
    $region39: #{tpu_custom_call.1} parent=1 // pred_check_branch
      %242 = sbr.rel (0) target = $region41
    $region40: #{tpu_custom_call.1} parent=1 // pred_region
      %s244 = ssub.s32 64, 64
      %245 = vsyncadd [#allocation6], %s244
      %s247 = sshll.u32 [#allocation9], 4
      %s248 = int_to_ptr.vmem [resolvable:$true] %s247
      %250 = dma.vmem_to_hbm [thread:$0]  %s248, 64, %s5, [#allocation6]
    $region41: #{tpu_custom_call.1} parent=1 // pred_fallthru
      _
    // Predicated region
    $region42: #{tpu_custom_call.1} parent=1 // pred_check
      _
    $region43: #{tpu_custom_call.1} parent=1 // pred_check_branch
      %252 = sbr.rel (0) target = $region45
    $region44: #{tpu_custom_call.1} parent=1 // pred_region
      %253 = dma.done [#allocation6], 64
    $region45: #{tpu_custom_call.1} parent=1 // pred_fallthru
      _
    %254 = vsyncpa [#allocation5], 1
    %255 = vsyncpa [#allocation8], 1
    %256 = vsyncpa [#allocation6], 1

// kernel: tpu_custom_call.1
$region0: #{tpu_custom_call.1}
  #allocation0 [shape = 'u32[]', space=smem, size = 0x4, offset = 0x4, fixed_abs, tag = 'smem constant byte address 0x4 - core index']
  #allocation1 [shape = 'u32[144,128]{1,0:T(1,128)}', space=vmem, size = 0x12000, scoped, tag = 'internal scratch']
  #allocation2 [shape = 'f32[2,128]{1,0:T(2,128)}', space=vmem, size = 0x400, scoped, tag = 'scratch operand']
  #allocation3 [shape = 'f32[2,128]{1,0:T(2,128)}', space=vmem, size = 0x400, scoped, tag = 'scratch operand']
  %s0 = inlined_call_operand.hbm [shape: f32[2,8,128], index: 0, kind: input, shape index: {}]
  %s1 = inlined_call_operand.vmem [shape: f32[1,128], index: 1, kind: input, shape index: {}]
  %s2 = inlined_call_operand.vmem [shape: f32[1,128], index: 2, kind: input, shape index: {}]
  %s3 = inlined_call_operand.hbm [shape: f32[128,256], index: 3, kind: input, shape index: {}]
  %s4 = inlined_call_operand.vmem [shape: f32[1,256], index: 4, kind: input, shape index: {}]
  %s5 = inlined_call_operand.hbm [shape: f32[2,256], index: 5, kind: output, shape index: {}]
  %s6 = sld [smem:[#allocation0]]
  $region46: #{tpu_custom_call.1} parent=0
    _
  %s8 = ssub.s32 1, %s6
  %s9 = scalar_select 0, %s8, %s6
  $region1: #{tpu_custom_call.1} parent=0
    #allocation4 [shape = 'u8[8192]{0}', space=vmem, size = 0x2000, scoped, tag = 'input window, operand 0, single buffered']
    #allocation5 [shape = 's32[1]{0}', space=sflag, size = 0x4, scoped, tag = 'scoped memory for tpu_custom_call.1']
    #allocation6 [shape = 's32[1]{0}', space=sflag, size = 0x4, scoped, tag = 'scoped memory for tpu_custom_call.1']
    #allocation7 [shape = 'u8[131072]{0}', space=vmem, size = 0x20000, scoped, tag = 'input window, operand 3, single buffered']
    #allocation8 [shape = 's32[1]{0}', space=sflag, size = 0x4, scoped, tag = 'scoped memory for tpu_custom_call.1']
    #allocation9 [shape = 'u8[2048]{0}', space=vmem, size = 0x800, scoped, tag = 'output window, operand 0, single buffered']
    %10 = vsyncpa [#allocation5], 0
    %11 = vsyncpa [#allocation8], 0
    %12 = vsyncpa [#allocation6], 0
    // Predicated region
    $region2: #{tpu_custom_call.1} parent=1 // pred_check
      _
    $region3: #{tpu_custom_call.1} parent=1 // pred_check_branch
      %14 = sbr.rel (0) target = $region5
    $region4: #{tpu_custom_call.1} parent=1 // pred_region
      %s16 = ssub.s32 256, 256
      %17 = vsyncadd [#allocation5], %s16
      %s18 = sshll.u32 [#allocation4], 4
      %s19 = int_to_ptr.vmem [resolvable:$true] %s18
      %24 = dma.hbm_to_vmem [thread:$0]  %s0, 256, %s19, [#allocation5], 128, 128, 8
    $region5: #{tpu_custom_call.1} parent=1 // pred_fallthru
      _
    // Predicated region
    $region6: #{tpu_custom_call.1} parent=1 // pred_check
      _
    $region7: #{tpu_custom_call.1} parent=1 // pred_check_branch
      %26 = sbr.rel (0) target = $region9
    $region8: #{tpu_custom_call.1} parent=1 // pred_region
      _
    $region9: #{tpu_custom_call.1} parent=1 // pred_fallthru
      _
    // Predicated region
    $region10: #{tpu_custom_call.1} parent=1 // pred_check
      _
    $region11: #{tpu_custom_call.1} parent=1 // pred_check_branch
      %28 = sbr.rel (0) target = $region13
    $region12: #{tpu_custom_call.1} parent=1 // pred_region
      _
    $region13: #{tpu_custom_call.1} parent=1 // pred_fallthru
      _
    // Predicated region
    $region14: #{tpu_custom_call.1} parent=1 // pred_check
      _
    $region15: #{tpu_custom_call.1} parent=1 // pred_check_branch
      %30 = sbr.rel (0) target = $region17
    $region16: #{tpu_custom_call.1} parent=1 // pred_region
      %s32 = ssub.s32 4096, 4096
      %33 = vsyncadd [#allocation8], %s32
      %s34 = sshll.u32 [#allocation7], 4
      %s35 = int_to_ptr.vmem [resolvable:$true] %s34
      %40 = dma.hbm_to_vmem [thread:$0]  %s3, 4096, %s35, [#allocation8], 256, 256, 16
    $region17: #{tpu_custom_call.1} parent=1 // pred_fallthru
      _
    // Predicated region
    $region18: #{tpu_custom_call.1} parent=1 // pred_check
      _
    $region19: #{tpu_custom_call.1} parent=1 // pred_check_branch
      %42 = sbr.rel (0) target = $region21
    $region20: #{tpu_custom_call.1} parent=1 // pred_region
      _
    $region21: #{tpu_custom_call.1} parent=1 // pred_fallthru
      _
    // Predicated region
    $region22: #{tpu_custom_call.1} parent=1 // pred_check
      _
    $region23: #{tpu_custom_call.1} parent=1 // pred_check_branch
      %44 = sbr.rel (0) target = $region25
    $region24: #{tpu_custom_call.1} parent=1 // pred_region
      %45 = dma.done [#allocation5], 256
    $region25: #{tpu_custom_call.1} parent=1 // pred_fallthru
      _
    // Predicated region
    $region26: #{tpu_custom_call.1} parent=1 // pred_check
      _
    $region27: #{tpu_custom_call.1} parent=1 // pred_check_branch
      %47 = sbr.rel (0) target = $region29
    $region28: #{tpu_custom_call.1} parent=1 // pred_region
      %48 = dma.done [#allocation8], 4096
    $region29: #{tpu_custom_call.1} parent=1 // pred_fallthru
      _
    %p49 = scmp.eq.s32.totalorder 0, 0
    // Predicated region
    $region30: #{tpu_custom_call.1} parent=1 // pred_check
      %p50 = pneg %p49
    $region31: #{tpu_custom_call.1} parent=1 // pred_check_branch
      %52 = sbr.rel (%p50) target = $region33
    $region32: #{tpu_custom_call.1} parent=1 // pred_region
      %53 = vst [vmem:[#allocation2] sm:$0x3] 0.0
    $region33: #{tpu_custom_call.1} parent=1 // pred_fallthru
      _
    %v54 = vld [vmem:[#allocation4] sm:$0xff]
    %v55 = vld [vmem:[#allocation4 + $0x8] sm:$0xff]
    %v56 = vld [vmem:[#allocation2] sm:$0x3]
    %v57 = vrot.slane %v54, 4
    %v58 = vadd.f32 %v54, %v57
    %v59 = vrot.slane %v58, 2
    %v60 = vadd.f32 %v58, %v59
    %v61 = vrot.slane %v60, 1
    %v62 = vadd.f32 %v60, %v61
    %v63 = vrot.slane %v55, 4
    %v64 = vadd.f32 %v55, %v63
    %v65 = vrot.slane %v64, 2
    %v66 = vadd.f32 %v64, %v65
    %v67 = vrot.slane %v66, 1
    %v68 = vadd.f32 %v66, %v67
    %vm71 = vcmask 1041409
    %v72 = vsel %vm71, %v68, %v62
    %v74 = vadd.f32 %v56, %v72
    %75 = vst [vmem:[#allocation2] sm:$0x3] %v74
    // Predicated region
    $region34: #{tpu_custom_call.1} parent=1 // pred_check
      %p76 = pneg %p49
    $region35: #{tpu_custom_call.1} parent=1 // pred_check_branch
      %78 = sbr.rel (%p76) target = $region37
    $region36: #{tpu_custom_call.1} parent=1 // pred_region
      %v79 = vld [vmem:[#allocation2] sm:$0x3]
      %v80 = vmul.f32 %v79, 0.125
      %vm81 = vcmask 1041408
      %v82 = vsel %vm81, %v80, 0.0
      %83 = vadd.xlane.f32.xlu0 %v82
      %v84 = vpop.xlane.xlu0 %83
      %v85 = vrcp.pop 128.0
      %v86 = vmul.f32 %v84, %v85
      %v87 = vsub.f32 %v80, %v86
      %v88 = vmul.f32 %v87, %v87
      %v89 = vsel %vm81, %v88, 0.0
      %90 = vadd.xlane.f32.xlu0 %v89
      %v91 = vpop.xlane.xlu0 %90
      %v92 = vmul.f32 %v91, %v85
      %v93 = vadd.f32 %v92, 1e-05
      %v94 = vrsqrt.pop %v93
      %v95 = vmul.f32 %v87, %v94
      %v96 = vld [vmem:[%s1] sm:$0x1]
      %v98 = vlaneseq
      %v99 = vshrl.u32 %v98, 7
      %v100 = vsub.s32 0, %v99
      %v101 = vrot.slane %v96, %v100
      %v103 = vmul.f32 %v95, %v101
      %v104 = vld [vmem:[%s2] sm:$0x1]
      %v106 = vlaneseq
      %v107 = vshrl.u32 %v106, 7
      %v108 = vsub.s32 0, %v107
      %v109 = vrot.slane %v104, %v108
      %v111 = vadd.f32 %v103, %v109
      %112 = vst [vmem:[#allocation3] sm:$0x3] %v111
      %v113 = vld [vmem:[#allocation3] sm:$0x3]
      %v114 = vld [vmem:[#allocation7] sm:$0xff]
      %v115 = vld [vmem:[#allocation7 + $0x8] sm:$0xff]
      %v116 = vld [vmem:[#allocation7 + $0x10] sm:$0xff]
      %v117 = vld [vmem:[#allocation7 + $0x18] sm:$0xff]
      %v118 = vld [vmem:[#allocation7 + $0x20] sm:$0xff]
      %v119 = vld [vmem:[#allocation7 + $0x28] sm:$0xff]
      %v120 = vld [vmem:[#allocation7 + $0x30] sm:$0xff]
      %v121 = vld [vmem:[#allocation7 + $0x38] sm:$0xff]
      %v122 = vld [vmem:[#allocation7 + $0x40] sm:$0xff]
      %v123 = vld [vmem:[#allocation7 + $0x48] sm:$0xff]
      %v124 = vld [vmem:[#allocation7 + $0x50] sm:$0xff]
      %v125 = vld [vmem:[#allocation7 + $0x58] sm:$0xff]
      %v126 = vld [vmem:[#allocation7 + $0x60] sm:$0xff]
      %v127 = vld [vmem:[#allocation7 + $0x68] sm:$0xff]
      %v128 = vld [vmem:[#allocation7 + $0x70] sm:$0xff]
      %v129 = vld [vmem:[#allocation7 + $0x78] sm:$0xff]
      %v130 = vld [vmem:[#allocation7 + $0x80] sm:$0xff]
      %v131 = vld [vmem:[#allocation7 + $0x88] sm:$0xff]
      %v132 = vld [vmem:[#allocation7 + $0x90] sm:$0xff]
      %v133 = vld [vmem:[#allocation7 + $0x98] sm:$0xff]
      %v134 = vld [vmem:[#allocation7 + $0xa0] sm:$0xff]
      %v135 = vld [vmem:[#allocation7 + $0xa8] sm:$0xff]
      %v136 = vld [vmem:[#allocation7 + $0xb0] sm:$0xff]
      %v137 = vld [vmem:[#allocation7 + $0xb8] sm:$0xff]
      %v138 = vld [vmem:[#allocation7 + $0xc0] sm:$0xff]
      %v139 = vld [vmem:[#allocation7 + $0xc8] sm:$0xff]
      %v140 = vld [vmem:[#allocation7 + $0xd0] sm:$0xff]
      %v141 = vld [vmem:[#allocation7 + $0xd8] sm:$0xff]
      %v142 = vld [vmem:[#allocation7 + $0xe0] sm:$0xff]
      %v143 = vld [vmem:[#allocation7 + $0xe8] sm:$0xff]
      %v144 = vld [vmem:[#allocation7 + $0xf0] sm:$0xff]
      %v145 = vld [vmem:[#allocation7 + $0xf8] sm:$0xff]
      %v146 = vld [vmem:[%s4] sm:$0x3]
      %v148 = vlaneseq
      %v149 = vshrl.u32 %v148, 7
      %v150 = vsub.s32 0, %v149
      %v151 = vrot.slane %v146, %v150
      %v152 = vlaneseq
      %v153 = vshrl.u32 %v152, 7
      %v154 = vsub.s32 1, %v153
      %v155 = vrot.slane %v146, %v154
      %158 = vmatprep.subr.mxu0 %v115
      %159 = vmatpush1.msra.mxu0 %v114
      %160 = vmatprep.subr.mxu0 %v117
      %161 = vmatpush1.msra.mxu0 %v116
      %162 = vmatprep.subr.mxu0 %v119
      %163 = vmatpush1.msra.mxu0 %v118
      %164 = vmatprep.subr.mxu0 %v121
      %165 = vmatpush1.msra.mxu0 %v120
      %166 = vmatprep.subr.mxu0 %v123
      %167 = vmatpush1.msra.mxu0 %v122
      %168 = vmatprep.subr.mxu0 %v125
      %169 = vmatpush1.msra.mxu0 %v124
      %170 = vmatprep.subr.mxu0 %v127
      %171 = vmatpush1.msra.mxu0 %v126
      %172 = vmatprep.subr.mxu0 %v129
      %173 = vmatpush1.msra.mxu0 %v128
      %174 = vmatprep.subr.mxu0 %v131
      %175 = vmatpush1.msra.mxu0 %v130
      %176 = vmatprep.subr.mxu0 %v133
      %177 = vmatpush1.msra.mxu0 %v132
      %178 = vmatprep.subr.mxu0 %v135
      %179 = vmatpush1.msra.mxu0 %v134
      %180 = vmatprep.subr.mxu0 %v137
      %181 = vmatpush1.msra.mxu0 %v136
      %182 = vmatprep.subr.mxu0 %v139
      %183 = vmatpush1.msra.mxu0 %v138
      %184 = vmatprep.subr.mxu0 %v141
      %185 = vmatpush1.msra.mxu0 %v140
      %186 = vmatprep.subr.mxu0 %v143
      %187 = vmatpush1.msra.mxu0 %v142
      %188 = vmatprep.subr.mxu0 %v145
      %189 = vmatpush1.msra.mxu0 %v144
      %190 = vmatprep.subr.mxu0 0.0
      %191 = vmatpush1.msra.mxu0 0.0
      %192 = vmatprep.subr.mxu0 0.0
      %193 = vmatpush1.msra.mxu0 0.0
      %194 = vmatprep.subr.mxu0 0.0
      %195 = vmatpush1.msra.mxu0 0.0
      %196 = vmatprep.subr.mxu0 0.0
      %197 = vmatpush1.msra.mxu0 0.0
      %198 = vmatprep.subr.mxu0 0.0
      %199 = vmatpush1.msra.mxu0 0.0
      %200 = vmatprep.subr.mxu0 0.0
      %201 = vmatpush1.msra.mxu0 0.0
      %202 = vmatprep.subr.mxu0 0.0
      %203 = vmatpush1.msra.mxu0 0.0
      %204 = vmatprep.subr.mxu0 0.0
      %205 = vmatpush1.msra.mxu0 0.0
      %206 = vmatprep.subr.mxu0 0.0
      %207 = vmatpush1.msra.mxu0 0.0
      %208 = vmatprep.subr.mxu0 0.0
      %209 = vmatpush1.msra.mxu0 0.0
      %210 = vmatprep.subr.mxu0 0.0
      %211 = vmatpush1.msra.mxu0 0.0
      %212 = vmatprep.subr.mxu0 0.0
      %213 = vmatpush1.msra.mxu0 0.0
      %214 = vmatprep.subr.mxu0 0.0
      %215 = vmatpush1.msra.mxu0 0.0
      %216 = vmatprep.subr.mxu0 0.0
      %217 = vmatpush1.msra.mxu0 0.0
      %218 = vmatprep.subr.mxu0 0.0
      %219 = vmatpush1.msra.mxu0 0.0
      %220 = vmatprep.subr.mxu0 0.0
      %221 = vmatpush1.msra.mxu0 0.0
      %222 = vmatprep.mubr.f32.mxu0 0.0
      %223 = vmatmul.mubr.f32.gmra.mrb[0].mxu0 %v113
      %v224 = vpop.f32.mrb[0].mxu0
      %v225 = vadd.f32 %v151, %v224
      %v226 = vpop.f32.mrb[0].mxu0
      %v227 = vadd.f32 %v155, %v226
      %228 = vdwg.mxu0
      %v231 = vcombine.low %v225, %v227
      %v233 = vunpack.c.l.s4 1983009808
      %v234 = vunpack.c.0.s8 %v233
      %v235 = vlaneseq
      %v236 = vshrl.u32 %v235, 7
      %v237 = vsub.s32 %v234, %v236
      %v238 = vrot.slane %v231, %v237
      %240 = vst [vmem:[#allocation9] sm:$0xf] %v238
    $region37: #{tpu_custom_call.1} parent=1 // pred_fallthru
      _
    // Predicated region
    $region38: #{tpu_custom_call.1} parent=1 // pred_check
      _
    $region39: #{tpu_custom_call.1} parent=1 // pred_check_branch
      %242 = sbr.rel (0) target = $region41
    $region40: #{tpu_custom_call.1} parent=1 // pred_region
      %s244 = ssub.s32 64, 64
      %245 = vsyncadd [#allocation6], %s244
      %s247 = sshll.u32 [#allocation9], 4
      %s248 = int_to_ptr.vmem [resolvable:$true] %s247
      %250 = dma.vmem_to_hbm [thread:$0]  %s248, 64, %s5, [#allocation6]
    $region41: #{tpu_custom_call.1} parent=1 // pred_fallthru
      _
    // Predicated region
    $region42: #{tpu_custom_call.1} parent=1 // pred_check
      _
    $region43: #{tpu_custom_call.1} parent=1 // pred_check_branch
      %252 = sbr.rel (0) target = $region45
    $region44: #{tpu_custom_call.1} parent=1 // pred_region
      %253 = dma.done [#allocation6], 64
    $region45: #{tpu_custom_call.1} parent=1 // pred_fallthru
      _
    %254 = vsyncpa [#allocation5], 1
    %255 = vsyncpa [#allocation8], 1
    %256 = vsyncpa [#allocation6], 1

</llo_original>
